<compile_context>
chip_gen: v7x
topology: tpu7x:2x2x1
jax: 0.10.0
libtpu: 0.0.40
codegen_flags: <defaults>
</compile_context>

<pallas_src>
import functools

import jax
import jax.numpy as jnp
from jax.experimental import pallas as pl
from jax.experimental.pallas import tpu as pltpu


def _lambda_mean_heads_kernel(x_ref, o_ref, *, num_heads, upcast):
    """x_ref: (H, L) slab in VMEM; o_ref: (1, L) lane-dense output row."""

    def load(h):
        row = x_ref[h:h + 1, :]  # static slice -> (1, L)
        return row.astype(jnp.float32) if upcast else row

    # Unrolled VPU adds over the (small, static) head axis.
    acc = load(0)
    for h in range(1, num_heads):
        acc = acc + load(h)

    inv_h = jnp.asarray(1.0 / num_heads, dtype=acc.dtype)  # hoisted constant
    o_ref[...] = (acc * inv_h).astype(o_ref.dtype)


def lambda_layer(x):
    """lambd(x) = mean(x, axis=2) via a single-step Pallas TPU kernel.

    x: (B, N, H, D) -> (B, N, D)
    """
    B, N, H, D = x.shape
    L = B * N * D

    # Layout plumbing outside the kernel: heads first, everything else folded
    # into one lane-dense axis. out[b*N*D + n*D + d] = mean_h x[b, n, h, d].
    x2 = jnp.transpose(x, (2, 0, 1, 3)).reshape(H, L)

    upcast = x.dtype != jnp.float32

    out_flat = pl.pallas_call(
        functools.partial(_lambda_mean_heads_kernel, num_heads=H, upcast=upcast),
        out_shape=jax.ShapeDtypeStruct((1, L), x.dtype),
        grid=(1,),
        # Full-extent blocks (== array dims), so the (8,128) tiling constraint
        # is satisfied regardless of H / L values.
        in_specs=[pl.BlockSpec((H, L), lambda i: (0, 0))],
        out_specs=pl.BlockSpec((1, L), lambda i: (0, 0)),
        compiler_params=pltpu.CompilerParams(
            dimension_semantics=("arbitrary",)
        ),
    )(x2)

    return out_flat.reshape(B, N, D)


if __name__ == "__main__":
    key = jax.random.PRNGKey(0)
    # Shapes consistent with CoLight's attention usage:
    # batch=2, agents=6, heads=5, hidden=32
    B, N, H, D = 2, 6, 5, 32
    x = jax.random.normal(key, (B, N, H, D), dtype=jnp.float32)

    out = jax.block_until_ready(lambda_layer(x))

    # Reference check (plain JAX) — same semantics as torch.mean(x, dim=2).
    ref = jnp.mean(x, axis=2)
    assert out.shape == (B, N, D)
    assert jnp.allclose(out, ref, atol=1e-5, rtol=1e-5)

    print("KERNEL_OK")
</pallas_src>

<mosaic_0001>
module attributes {stable_mosaic.version = 11 : i64} {
  func.func @_lambda_mean_heads_kernel(%arg0: i32, %arg1: memref<5x384xf32, #tpu.memory_space<vmem>>, %arg2: memref<1x384xf32, #tpu.memory_space<vmem>>) attributes {dimension_semantics = [#tpu.dimension_semantics<arbitrary>], iteration_bounds = array<i64: 1>, scalar_prefetch = 0 : i64, scratch_operands = 0 : i64, tpu.core_type = #tpu.core_type<tc>, window_params = [{pipeline_mode = #tpu.pipeline_mode<synchronous>, transform_indices = @transform_0, window_bounds = array<i64: 5, 384>}, {pipeline_mode = #tpu.pipeline_mode<synchronous>, transform_indices = @transform_1, window_bounds = array<i64: 1, 384>}]} {
    %c0 = arith.constant 0 : index
    %c0_0 = arith.constant 0 : index
    %0 = vector.load %arg1[%c0, %c0_0] : memref<5x384xf32, #tpu.memory_space<vmem>>, vector<1x384xf32>
    %c1 = arith.constant 1 : index
    %c0_1 = arith.constant 0 : index
    %1 = vector.load %arg1[%c1, %c0_1] : memref<5x384xf32, #tpu.memory_space<vmem>>, vector<1x384xf32>
    %2 = arith.addf %0, %1 : vector<1x384xf32>
    %c2 = arith.constant 2 : index
    %c0_2 = arith.constant 0 : index
    %3 = vector.load %arg1[%c2, %c0_2] : memref<5x384xf32, #tpu.memory_space<vmem>>, vector<1x384xf32>
    %4 = arith.addf %2, %3 : vector<1x384xf32>
    %c3 = arith.constant 3 : index
    %c0_3 = arith.constant 0 : index
    %5 = vector.load %arg1[%c3, %c0_3] : memref<5x384xf32, #tpu.memory_space<vmem>>, vector<1x384xf32>
    %6 = arith.addf %4, %5 : vector<1x384xf32>
    %c4 = arith.constant 4 : index
    %c0_4 = arith.constant 0 : index
    %7 = vector.load %arg1[%c4, %c0_4] : memref<5x384xf32, #tpu.memory_space<vmem>>, vector<1x384xf32>
    %8 = arith.addf %6, %7 : vector<1x384xf32>
    %cst = arith.constant 2.000000e-01 : f32
    %9 = vector.broadcast %cst : f32 to vector<1x384xf32>
    %10 = arith.mulf %8, %9 : vector<1x384xf32>
    %c0_5 = arith.constant 0 : index
    %c0_6 = arith.constant 0 : index
    %11 = vector.load %arg2[%c0_5, %c0_6] : memref<1x384xf32, #tpu.memory_space<vmem>>, vector<1x384xf32>
    tpu.vector_store %arg2[%c0_5, %c0_6], %10 {strides = array<i32>} : memref<1x384xf32, #tpu.memory_space<vmem>>, vector<1x384xf32>,
    return
  }
  func.func @transform_0(%arg0: i32) -> (i32, i32) {
    %c0_i32 = arith.constant 0 : i32
    %c0_i32_0 = arith.constant 0 : i32
    %c0_i32_1 = arith.constant 0 : i32
    return %c0_i32, %c0_i32_0 : i32, i32
  }
  func.func @transform_1(%arg0: i32) -> (i32, i32) {
    %c0_i32 = arith.constant 0 : i32
    %c0_i32_0 = arith.constant 0 : i32
    %c0_i32_1 = arith.constant 0 : i32
    return %c0_i32, %c0_i32_0 : i32, i32
  }
}

</mosaic_0001>

<llo_original>
// kernel: tpu_custom_call.1
$region0: #{tpu_custom_call.1}
  #allocation0 [shape = 'u32[]', space=smem, size = 0x4, offset = 0x4, fixed_abs, tag = 'smem constant byte address 0x4 - core index']
  #allocation1 [shape = 'u32[144,128]{1,0:T(1,128)}', space=vmem, size = 0x12000, scoped, tag = 'internal scratch']
  %s0 = inlined_call_operand.hbm [shape: f32[5,384], index: 0, kind: input, shape index: {}]
  %s1 = inlined_call_operand.hbm [shape: f32[1,384], index: 1, kind: output, shape index: {}]
  %s2 = sld [smem:[#allocation0]]
  $region18: #{tpu_custom_call.1} parent=0
    _
  %s4 = ssub.s32 1, %s2
  %s5 = scalar_select 0, %s4, %s2
  $region1: #{tpu_custom_call.1} parent=0
    #allocation2 [shape = 'u8[12288]{0}', space=vmem, size = 0x3000, scoped, tag = 'input window, operand 0, single buffered']
    #allocation3 [shape = 's32[1]{0}', space=sflag, size = 0x4, scoped, tag = 'scoped memory for tpu_custom_call.1']
    #allocation4 [shape = 's32[1]{0}', space=sflag, size = 0x4, scoped, tag = 'scoped memory for tpu_custom_call.1']
    #allocation5 [shape = 'u8[1536]{0}', space=vmem, size = 0x800, scoped, tag = 'output window, operand 0, single buffered']
    %6 = vsyncpa [#allocation3], 0
    %7 = vsyncpa [#allocation4], 0
    // Predicated region
    $region2: #{tpu_custom_call.1} parent=1 // pred_check
      _
    $region3: #{tpu_custom_call.1} parent=1 // pred_check_branch
      %9 = sbr.rel (0) target = $region5
    $region4: #{tpu_custom_call.1} parent=1 // pred_region
      %s11 = ssub.s32 384, 384
      %12 = vsyncadd [#allocation3], %s11
      %s14 = sshll.u32 [#allocation2], 4
      %s15 = int_to_ptr.vmem [resolvable:$true] %s14
      %17 = dma.hbm_to_vmem [thread:$0]  %s0, 384, %s15, [#allocation3]
    $region5: #{tpu_custom_call.1} parent=1 // pred_fallthru
      _
    // Predicated region
    $region6: #{tpu_custom_call.1} parent=1 // pred_check
      _
    $region7: #{tpu_custom_call.1} parent=1 // pred_check_branch
      %19 = sbr.rel (0) target = $region9
    $region8: #{tpu_custom_call.1} parent=1 // pred_region
      %20 = dma.done [#allocation3], 384
    $region9: #{tpu_custom_call.1} parent=1 // pred_fallthru
      _
    %v21 = vld [vmem:[#allocation2] ss:$8 sm:$0x7]
    %s22 = scalar_lea.vmem [#allocation2], 1
    %v23 = vld [vmem:[%s22] ss:$8 sm:$0x7]
    %v24 = vadd.f32 %v21, %v23
    %s25 = scalar_lea.vmem [#allocation2], 2
    %v26 = vld [vmem:[%s25] ss:$8 sm:$0x7]
    %v27 = vadd.f32 %v24, %v26
    %s28 = scalar_lea.vmem [#allocation2], 3
    %v29 = vld [vmem:[%s28] ss:$8 sm:$0x7]
    %v30 = vadd.f32 %v27, %v29
    %s31 = scalar_lea.vmem [#allocation2], 4
    %v32 = vld [vmem:[%s31] ss:$8 sm:$0x7]
    %v33 = vadd.f32 %v30, %v32
    %v34 = vmul.f32 %v33, 0.2
    %v35 = vlaneseq
    %vm36 = vcmp.ge.s32.totalorder %v35, 0
    %vm37 = vcmp.lt.s32.totalorder %v35, 384
    %vm38 = vmand %vm36, %vm37
    %39 = vst.msk [vmem:[#allocation5] sm:$0x7] %vm38, %v34
    // Predicated region
    $region10: #{tpu_custom_call.1} parent=1 // pred_check
      _
    $region11: #{tpu_custom_call.1} parent=1 // pred_check_branch
      %41 = sbr.rel (0) target = $region13
    $region12: #{tpu_custom_call.1} parent=1 // pred_region
      %s43 = ssub.s32 48, 48
      %44 = vsyncadd [#allocation4], %s43
      %s46 = sshll.u32 [#allocation5], 4
      %s47 = int_to_ptr.vmem [resolvable:$true] %s46
      %49 = dma.vmem_to_hbm [thread:$0]  %s47, 48, %s1, [#allocation4]
    $region13: #{tpu_custom_call.1} parent=1 // pred_fallthru
      _
    // Predicated region
    $region14: #{tpu_custom_call.1} parent=1 // pred_check
      _
    $region15: #{tpu_custom_call.1} parent=1 // pred_check_branch
      %51 = sbr.rel (0) target = $region17
    $region16: #{tpu_custom_call.1} parent=1 // pred_region
      %52 = dma.done [#allocation4], 48
    $region17: #{tpu_custom_call.1} parent=1 // pred_fallthru
      _
    %53 = vsyncpa [#allocation3], 1
    %54 = vsyncpa [#allocation4], 1

</llo_original>
